<compile_context>
chip_gen: v5e
topology: v5e:2x2
jax: 0.10.0
libtpu: 0.0.40
codegen_flags: <defaults>
</compile_context>

<pallas_src>
import math

import jax
import jax.numpy as jnp
from jax.experimental import pallas as pl
from jax.experimental.pallas import tpu as pltpu


def make_positional_encoding(d_model: int, max_len: int = 5000, dtype=jnp.float32):
    """Build the (1, max_len, d_model) sinusoidal table (matches PyTorch init).

    Build directly in the model dtype so forward never pays a per-call cast of
    the full table.
    """
    position = jnp.arange(max_len, dtype=jnp.float32)[:, None]            # (max_len, 1)
    div_term = jnp.exp(
        jnp.arange(0, d_model, 2, dtype=jnp.float32) * (-math.log(10000.0) / d_model)
    )                                                                     # (ceil(D/2),)
    angles = position * div_term                                          # (max_len, ceil(D/2))
    pe = jnp.zeros((max_len, d_model), dtype=jnp.float32)
    pe = pe.at[:, 0::2].set(jnp.sin(angles))
    pe = pe.at[:, 1::2].set(jnp.cos(angles)[:, : d_model // 2])           # odd columns
    return pe[None].astype(dtype)                                         # (1, max_len, D)


def _add_pe_kernel(x_ref, pe_ref, o_ref):
    # Refs are (tile_s, tile_d): leading size-1 batch dim squeezed by the BlockSpec.
    o_ref[...] = x_ref[...] + pe_ref[...]


# ~4 MiB per-stream block: 3 streams x 2 pipeline buffers = 24 MiB, inside the
# 32 MiB scoped-VMEM budget on every generation (v5e/v6e default scoped 16/32,
# raised below; v7x 32 MiB scoped / 64 MiB physical).
_TARGET_BLOCK_BYTES = 4 * 1024 * 1024


def _min_sublane(itemsize: int) -> int:
    return {4: 8, 2: 16, 1: 32}.get(itemsize, 8)


def _pick_tiles(n_rows: int, n_cols: int, itemsize: int,
                target_bytes: int = _TARGET_BLOCK_BYTES):
    """(tile_s, tile_d) sized against the *lane-padded* physical block bytes."""
    sublane = _min_sublane(itemsize)
    lane = 128
    cols_pad = -(-n_cols // lane) * lane              # physical lanes the block occupies
    row_bytes = cols_pad * itemsize
    if sublane * row_bytes <= target_bytes:
        # Common case: full-width block, tile the sequence axis.
        tile_d = n_cols
        tile_s = max(sublane, (target_bytes // row_bytes) // sublane * sublane)
        if tile_s >= n_rows:
            tile_s = n_rows                           # full-extent block: always legal
    else:
        # A single minimum-height row-block already exceeds the budget:
        # tile the lane axis too (blocks of k*128 lanes).
        tile_s = min(sublane, n_rows)
        tile_d = max(lane, (target_bytes // max(tile_s * itemsize, 1)) // lane * lane)
        if tile_d >= n_cols:
            tile_d = n_cols
    return int(tile_s), int(tile_d)


def positional_encoding_forward(x: jax.Array, pe: jax.Array, *, donate_x: bool = False) -> jax.Array:
    """x: (B, S, D); pe: (1, max_len, D). Returns x + pe[:, :S]."""
    B, S, D = x.shape
    one, max_len, D_pe = pe.shape
    assert one == 1 and D_pe == D, "pe shape mismatch"
    assert S <= max_len, "sequence longer than the positional-encoding table"
    if pe.dtype != x.dtype:
        # Fail loudly instead of silently re-casting the full max_len x D table
        # on every forward; build the table in the model dtype at init.
        raise TypeError(f"pe dtype {pe.dtype} != x dtype {x.dtype}; "
                        f"build pe with make_positional_encoding(..., dtype=x.dtype)")

    # Lane-dense folding: if D isn't a multiple of 128, fold `fold` consecutive
    # sequence rows into the lane axis (D_r = lcm(D, 128)) so every store is an
    # unmasked lane-dense vst.  S is zero-padded up to a fold multiple and the
    # output sliced back; the pad/slice pass is far cheaper than running the
    # whole kernel at partial lane utilization.
    fold = 1 if D % 128 == 0 else 128 // math.gcd(D, 128)
    S_pad = -(-S // fold) * fold
    S_r, D_r = S_pad // fold, D * fold
    itemsize = jnp.dtype(x.dtype).itemsize
    sublane = _min_sublane(itemsize)

    tile_s, tile_d = _pick_tiles(S_r, D_r, itemsize)

    x_p = x if S_pad == S else jnp.pad(x, ((0, 0), (0, S_pad - S), (0, 0)))

    # pe slab: pass the whole table (no copy, index_map limits reads) whenever
    # its length is fold-divisible and any sub-8-row full-extent block has
    # matching extents; otherwise slice/pad it to exactly S_pad rows.
    full_table_ok = (max_len % fold == 0) and (S_pad <= max_len) and \
                    (tile_s % sublane == 0 or S_pad == max_len)
    if full_table_ok:
        pe_use, L = pe, max_len
    else:
        rows = min(S_pad, max_len)
        pe_use = pe[:, :rows, :]
        if S_pad > rows:
            pe_use = jnp.pad(pe_use, ((0, 0), (0, S_pad - rows), (0, 0)))
        L = S_pad

    x_r = x_p.reshape(B, S_r, D_r)          # contiguous reshape: metadata only
    pe_r = pe_use.reshape(1, L // fold, D_r)

    n_s = pl.cdiv(S_r, tile_s)
    n_d = pl.cdiv(D_r, tile_d)

    block = (pl.Squeezed(), tile_s, tile_d)
    # Grid order: batch innermost so the pe block (b-invariant index_map) stays
    # resident in VMEM across the batch; leading axis kept >= 2 when possible so
    # v7x megacore sharding never idles a TensorCore on a degenerate axis.
    if n_d == 1:
        if n_s >= 2:
            grid = (n_s, B)
            x_map = lambda s, b: (b, s, 0)
            pe_map = lambda s, b: (0, s, 0)
        else:
            grid = (B,)                      # single sequence tile -> 1-D grid over batch
            x_map = lambda b: (b, 0, 0)
            pe_map = lambda b: (0, 0, 0)
    else:
        # Extremely wide rows: also tile the lane axis.
        grid = (n_d, n_s, B)
        x_map = lambda d, s, b: (b, s, d)
        pe_map = lambda d, s, b: (0, s, d)

    call_kwargs = {}
    if donate_x:
        # x_r and the output have identical shape/dtype; alias to drop the extra
        # B*S*D HBM output allocation when the caller can donate x.
        call_kwargs["input_output_aliases"] = {0: 0}

    out_r = pl.pallas_call(
        _add_pe_kernel,
        out_shape=jax.ShapeDtypeStruct((B, S_r, D_r), x.dtype),
        grid_spec=pltpu.PrefetchScalarGridSpec(
            num_scalar_prefetch=0,
            grid=grid,
            in_specs=[
                pl.BlockSpec(block, x_map),    # x tile
                pl.BlockSpec(block, pe_map),   # pe tile, constant in b
            ],
            out_specs=pl.BlockSpec(block, x_map),
        ),
        compiler_params=pltpu.CompilerParams(
            dimension_semantics=("parallel",) * len(grid),
            vmem_limit_bytes=32 * 1024 * 1024,
        ),
        **call_kwargs,
    )(x_r, pe_r)

    out = out_r.reshape(B, S_pad, D)
    return out if S_pad == S else out[:, :S, :]


if __name__ == "__main__":
    key = jax.random.PRNGKey(0)
    k1, k2, k3 = jax.random.split(key, 3)
    MAX_LEN = 64  # semantics identical to max_len=5000, just small/deterministic

    # Case 1: non-lane-aligned d_model (D=32) -> lane-folding path, no S padding.
    B, S, D = 2, 8, 32
    x = jax.random.normal(k1, (B, S, D), dtype=jnp.float32)
    pe = make_positional_encoding(D, MAX_LEN, dtype=jnp.float32)
    out = jax.block_until_ready(positional_encoding_forward(x, pe))
    ref = x + pe[:, :S, :]
    assert out.shape == (B, S, D)
    assert jnp.allclose(out, ref, atol=1e-6, rtol=1e-6)

    # Case 2: lane-aligned d_model (D=128) -> direct tiled path, full pe table passed.
    B2, S2, D2 = 2, 16, 128
    x2 = jax.random.normal(k2, (B2, S2, D2), dtype=jnp.float32)
    pe2 = make_positional_encoding(D2, MAX_LEN, dtype=jnp.float32)
    out2 = jax.block_until_ready(positional_encoding_forward(x2, pe2))
    ref2 = x2 + pe2[:, :S2, :]
    assert jnp.allclose(out2, ref2, atol=1e-6, rtol=1e-6)

    # Case 3: D=40, S=10 -> fold=16 with S padded to 16 and the output sliced back
    # (exercises the robust lane-folding fallback that used to drop to masked stores).
    B3, S3, D3 = 2, 10, 40
    x3 = jax.random.normal(k3, (B3, S3, D3), dtype=jnp.float32)
    pe3 = make_positional_encoding(D3, MAX_LEN, dtype=jnp.float32)
    out3 = jax.block_until_ready(positional_encoding_forward(x3, pe3))
    ref3 = x3 + pe3[:, :S3, :]
    assert out3.shape == (B3, S3, D3)
    assert jnp.allclose(out3, ref3, atol=1e-6, rtol=1e-6)

    print("KERNEL_OK")
</pallas_src>

<mosaic_0001>
module attributes {stable_mosaic.version = 11 : i64} {
  func.func @_add_pe_kernel(%arg0: i32, %arg1: memref<1x2x128xf32, #tpu.memory_space<vmem>>, %arg2: memref<1x2x128xf32, #tpu.memory_space<vmem>>, %arg3: memref<1x2x128xf32, #tpu.memory_space<vmem>>) attributes {dimension_semantics = [#tpu.dimension_semantics<parallel>], iteration_bounds = array<i64: 2>, scalar_prefetch = 0 : i64, scratch_operands = 0 : i64, tpu.core_type = #tpu.core_type<tc>, window_params = [{transform_indices = @transform_0, window_bounds = array<i64: 1, 2, 128>}, {pipeline_mode = #tpu.pipeline_mode<synchronous>, transform_indices = @transform_1, window_bounds = array<i64: 1, 2, 128>}, {transform_indices = @transform_2, window_bounds = array<i64: 1, 2, 128>}]} {
    %c0 = arith.constant 0 : index
    %c0_0 = arith.constant 0 : index
    %c0_1 = arith.constant 0 : index
    %0 = vector.load %arg1[%c0, %c0_0, %c0_1] : memref<1x2x128xf32, #tpu.memory_space<vmem>>, vector<1x2x128xf32>
    %1 = vector.shape_cast %0 : vector<1x2x128xf32> to vector<2x128xf32>
    %c0_2 = arith.constant 0 : index
    %c0_3 = arith.constant 0 : index
    %c0_4 = arith.constant 0 : index
    %2 = vector.load %arg2[%c0_2, %c0_3, %c0_4] : memref<1x2x128xf32, #tpu.memory_space<vmem>>, vector<1x2x128xf32>
    %3 = vector.shape_cast %2 : vector<1x2x128xf32> to vector<2x128xf32>
    %4 = arith.addf %1, %3 : vector<2x128xf32>
    %c0_5 = arith.constant 0 : index
    %c0_6 = arith.constant 0 : index
    %c0_7 = arith.constant 0 : index
    %5 = vector.load %arg3[%c0_5, %c0_6, %c0_7] : memref<1x2x128xf32, #tpu.memory_space<vmem>>, vector<1x2x128xf32>
    %6 = vector.shape_cast %5 : vector<1x2x128xf32> to vector<2x128xf32>
    %7 = vector.shape_cast %4 : vector<2x128xf32> to vector<1x2x128xf32>
    tpu.vector_store %arg3[%c0_5, %c0_6, %c0_7], %7 {strides = array<i32>} : memref<1x2x128xf32, #tpu.memory_space<vmem>>, vector<1x2x128xf32>,
    return
  }
  func.func @transform_0(%arg0: i32) -> (i32, i32, i32) {
    %c0_i32 = arith.constant 0 : i32
    %c0_i32_0 = arith.constant 0 : i32
    %c0_i32_1 = arith.constant 0 : i32
    return %arg0, %c0_i32, %c0_i32_0 : i32, i32, i32
  }
  func.func @transform_1(%arg0: i32) -> (i32, i32, i32) {
    %c0_i32 = arith.constant 0 : i32
    %c0_i32_0 = arith.constant 0 : i32
    %c0_i32_1 = arith.constant 0 : i32
    %c0_i32_2 = arith.constant 0 : i32
    return %c0_i32, %c0_i32_0, %c0_i32_1 : i32, i32, i32
  }
  func.func @transform_2(%arg0: i32) -> (i32, i32, i32) {
    %c0_i32 = arith.constant 0 : i32
    %c0_i32_0 = arith.constant 0 : i32
    %c0_i32_1 = arith.constant 0 : i32
    return %arg0, %c0_i32, %c0_i32_0 : i32, i32, i32
  }
}

</mosaic_0001>

<llo_original>
// kernel: tpu_custom_call.1
$region0: #{tpu_custom_call.1}
  #allocation0 [shape = 'u32[]', space=smem, size = 0x4, offset = 0x4, fixed_abs, tag = 'smem constant byte address 0x4 - core index']
  #allocation1 [shape = 'u32[72,128]{1,0:T(1,128)}', space=vmem, size = 0x9000, scoped, tag = 'internal scratch']
  %s0 = inlined_call_operand.hbm [shape: f32[2,2,128], index: 0, kind: input, shape index: {}]
  %s1 = inlined_call_operand.hbm [shape: f32[1,2,128], index: 1, kind: input, shape index: {}]
  %s2 = inlined_call_operand.hbm [shape: f32[2,2,128], index: 2, kind: output, shape index: {}]
  %s3 = sld [smem:[#allocation0]]
  $region49: #{tpu_custom_call.1} parent=0
    _
  %s5 = ssub.s32 1, %s3
  %s6 = scalar_select 0, %s5, %s3
  $region1: #{tpu_custom_call.1} parent=0
    #allocation2 [shape = 'u8[2048]{0}', space=vmem, size = 0x800, scoped, tag = 'input window, operand 0']
    #allocation3 [shape = 's32[2]{0}', space=sflag, size = 0x8, scoped, tag = 'scoped memory for tpu_custom_call.1']
    #allocation4 [shape = 's32[2]{0}', space=sflag, size = 0x8, scoped, tag = 'scoped memory for tpu_custom_call.1']
    #allocation5 [shape = 'u8[1024]{0}', space=vmem, size = 0x400, scoped, tag = 'input window, operand 1, single buffered']
    #allocation6 [shape = 's32[1]{0}', space=sflag, size = 0x4, scoped, tag = 'scoped memory for tpu_custom_call.1']
    #allocation7 [shape = 'u8[2048]{0}', space=vmem, size = 0x800, scoped, tag = 'output window, operand 0']
    %7 = vsyncpa [#allocation3], 0
    %s8 = scalar_lea.sflag [#allocation3], 1
    %9 = vsyncpa %s8, 0
    %10 = vsyncpa [#allocation6], 0
    %11 = vsyncpa [#allocation4], 0
    %s12 = scalar_lea.sflag [#allocation4], 1
    %13 = vsyncpa %s12, 0
    loop: start=0, step=1, limit=4
    $region2: #{tpu_custom_call.1} parent=1 // loop_pre_header
      _
    $region3: #{tpu_custom_call.1} parent=1 // loop_header
      %s15 = sphi 0, %s19
      %p16 = scmp.ge.s32.totalorder %s15, 4
      %s25 = sphi 0, %s27
      %s28 = sphi 0, %s25
      %s29 = sphi 0, %s28
      %s45 = sphi 0, %s29
      %s49 = sphi 0, %s49
      %s51 = sphi 0, %s49
      %s52 = sphi 0, %s51
      %s66 = sphi 0, %s52
      %s72 = sphi 0, %s74
      %s75 = sphi 0, %s72
      %s76 = sphi 0, %s75
      %s92 = sphi 0, %s76
    $region4: #{tpu_custom_call.1} parent=1 // loop_header_branch
      %18 = sbr.rel (%p16) target = $region8
    $region5: #{tpu_custom_call.1} parent=1 // loop_body
      %s20 = ssub.s32 %s15, 1
      %s21 = ssub.s32 %s15, 2
      %s22 = sadd.s32 %s15, 1
      %s23 = ssub.s32 %s15, %s22
      %p24 = scmp.eq.s32.totalorder %s23, 0
      %s26 = sadd.s32 %s25, 1
      %s27 = scalar_select %p24, %s25, %s26
      %p30 = pneg %p24
      %p31 = scmp.eq.s32.totalorder %s15, 1
      %p32 = por %p30, %p31
      %p33 = scmp.ne.s32.totalorder %s25, %s28
      %p34 = scmp.eq.s32.totalorder %s15, 0
      %p35 = por %p33, %p34
      %p36 = scmp.ne.s32.totalorder %s25, %s28
      %p37 = scmp.eq.s32.totalorder %s20, 1
      %p38 = por %p36, %p37
      %p39 = scmp.ne.s32.totalorder %s28, %s29
      %p40 = scmp.eq.s32.totalorder %s20, 0
      %p41 = por %p39, %p40
      %p42 = scmp.ne.s32.totalorder %s28, %s29
      %p43 = scmp.eq.s32.totalorder %s21, 1
      %p44 = por %p42, %p43
      %p46 = scmp.ne.s32.totalorder %s29, %s45
      %p47 = scmp.eq.s32.totalorder %s21, 0
      %p48 = por %p46, %p47
      %s50 = sadd.s32 %s49, 1
      %p53 = scmp.eq.s32.totalorder %s15, 1
      %p54 = scmp.ne.s32.totalorder %s49, %s51
      %p55 = scmp.eq.s32.totalorder %s15, 0
      %p56 = por %p54, %p55
      %p57 = scmp.ne.s32.totalorder %s49, %s51
      %p58 = scmp.eq.s32.totalorder %s20, 1
      %p59 = por %p57, %p58
      %p60 = scmp.ne.s32.totalorder %s51, %s52
      %p61 = scmp.eq.s32.totalorder %s20, 0
      %p62 = por %p60, %p61
      %p63 = scmp.ne.s32.totalorder %s51, %s52
      %p64 = scmp.eq.s32.totalorder %s21, 1
      %p65 = por %p63, %p64
      %p67 = scmp.ne.s32.totalorder %s52, %s66
      %p68 = scmp.eq.s32.totalorder %s21, 0
      %p69 = por %p67, %p68
      %s70 = ssub.s32 %s15, %s22
      %p71 = scmp.eq.s32.totalorder %s70, 0
      %s73 = sadd.s32 %s72, 1
      %s74 = scalar_select %p71, %s72, %s73
      %p77 = pneg %p71
      %p78 = scmp.eq.s32.totalorder %s15, 1
      %p79 = por %p77, %p78
      %p80 = scmp.ne.s32.totalorder %s72, %s75
      %p81 = scmp.eq.s32.totalorder %s15, 0
      %p82 = por %p80, %p81
      %p83 = scmp.ne.s32.totalorder %s72, %s75
      %p84 = scmp.eq.s32.totalorder %s20, 1
      %p85 = por %p83, %p84
      %p86 = scmp.ne.s32.totalorder %s75, %s76
      %p87 = scmp.eq.s32.totalorder %s20, 0
      %p88 = por %p86, %p87
      %p89 = scmp.ne.s32.totalorder %s75, %s76
      %p90 = scmp.eq.s32.totalorder %s21, 1
      %p91 = por %p89, %p90
      %p93 = scmp.ne.s32.totalorder %s76, %s92
      %p94 = scmp.eq.s32.totalorder %s21, 0
      %p95 = por %p93, %p94
      %p96 = scmp.le.s32.totalorder 1, %s15
      %p97 = scmp.lt.s32.totalorder %s15, 3
      %p98 = pnand %p96, %p97
      %p99 = pneg %p98
      // Predicated region
      $region9: #{tpu_custom_call.1} parent=5 // pred_check
        _
      $region10: #{tpu_custom_call.1} parent=5 // pred_check_branch
        %101 = sbr.rel (%p98) target = $region12
      $region11: #{tpu_custom_call.1} parent=5 // pred_region
        %s102 = ssub.s32 %s15, 1
        // Predicated region
        $region13: #{tpu_custom_call.1} parent=11 // pred_check
          %p103 = pneg %p62
        $region14: #{tpu_custom_call.1} parent=11 // pred_check_branch
          %105 = sbr.rel (%p103) target = $region16
        $region15: #{tpu_custom_call.1} parent=11 // pred_region
          %107 = vsyncadd [#allocation6], 0
          %s109 = sshll.u32 %s1, 4
          %s110 = int_to_ptr.hbm [resolvable:$true] %s109
          %s111 = sshll.u32 [#allocation5], 4
          %s112 = int_to_ptr.vmem [resolvable:$true] %s111
          %114 = dma.hbm_to_vmem [thread:$0]  %s110, 32, %s112, [#allocation6]
        $region16: #{tpu_custom_call.1} parent=11 // pred_fallthru
          _
      $region12: #{tpu_custom_call.1} parent=5 // pred_fallthru
        _
      %p115 = scmp.lt.s32.totalorder %s15, 2
      // Predicated region
      $region17: #{tpu_custom_call.1} parent=5 // pred_check
        %p116 = pneg %p115
      $region18: #{tpu_custom_call.1} parent=5 // pred_check_branch
        %118 = sbr.rel (%p116) target = $region20
      $region19: #{tpu_custom_call.1} parent=5 // pred_region
        // Predicated region
        $region21: #{tpu_custom_call.1} parent=19 // pred_check
          %p119 = pneg %p35
        $region22: #{tpu_custom_call.1} parent=19 // pred_check_branch
          %121 = sbr.rel (%p119) target = $region24
        $region23: #{tpu_custom_call.1} parent=19 // pred_region
          %s122 = sand.u32 %s25, 1
          %s123 = scalar_lea.sflag [#allocation3], %s122
          %s124 = sand.u32 %s25, 1
          %s125 = smul.addr %s124, 2
          %s126 = scalar_lea.vmem [#allocation2], %s125
          %128 = vsyncadd %s123, 0
          %s129 = smul.addr %s15, 2
          %s130 = scalar_lea.hbm %s0, %s129
          %s132 = sshll.u32 %s130, 4
          %s133 = int_to_ptr.hbm [resolvable:$true] %s132
          %s134 = sshll.u32 %s126, 4
          %s135 = int_to_ptr.vmem [resolvable:$true] %s134
          %137 = dma.hbm_to_vmem [thread:$0]  %s133, 32, %s135, %s123
        $region24: #{tpu_custom_call.1} parent=19 // pred_fallthru
          _
      $region20: #{tpu_custom_call.1} parent=5 // pred_fallthru
        _
      %p138 = scmp.le.s32.totalorder 1, %s15
      %p139 = scmp.lt.s32.totalorder %s15, 3
      %p140 = pnand %p138, %p139
      %p141 = pneg %p140
      // Predicated region
      $region25: #{tpu_custom_call.1} parent=5 // pred_check
        _
      $region26: #{tpu_custom_call.1} parent=5 // pred_check_branch
        %143 = sbr.rel (%p140) target = $region28
      $region27: #{tpu_custom_call.1} parent=5 // pred_region
        %s144 = ssub.s32 %s15, 1
        %s145 = sand.u32 %s28, 1
        %s146 = scalar_lea.sflag [#allocation3], %s145
        %s147 = sand.u32 %s28, 1
        %s148 = smul.addr %s147, 2
        %s149 = scalar_lea.vmem [#allocation2], %s148
        // Predicated region
        $region29: #{tpu_custom_call.1} parent=27 // pred_check
          %p150 = pneg %p41
        $region30: #{tpu_custom_call.1} parent=27 // pred_check_branch
          %152 = sbr.rel (%p150) target = $region32
        $region31: #{tpu_custom_call.1} parent=27 // pred_region
          %154 = dma.done %s146, 32
        $region32: #{tpu_custom_call.1} parent=27 // pred_fallthru
          _
        // Predicated region
        $region33: #{tpu_custom_call.1} parent=27 // pred_check
          %p155 = pneg %p62
        $region34: #{tpu_custom_call.1} parent=27 // pred_check_branch
          %157 = sbr.rel (%p155) target = $region36
        $region35: #{tpu_custom_call.1} parent=27 // pred_region
          %159 = dma.done [#allocation6], 32
        $region36: #{tpu_custom_call.1} parent=27 // pred_fallthru
          _
        %s160 = sand.u32 %s28, 1
        %s161 = scalar_lea.sflag [#allocation3], %s160
        %s162 = sand.u32 %s28, 1
        %s163 = smul.addr %s162, 2
        %s164 = scalar_lea.vmem [#allocation2], %s163
        %p165 = pneg %p41
        %p166 = pneg %p38
        %p167 = pneg %p62
        %p168 = pneg %p59
        %p169 = pneg %p88
        %p170 = pneg %p85
        %s171 = sand.u32 %s75, 1
        %s172 = scalar_lea.sflag [#allocation4], %s171
        %s173 = sand.u32 %s75, 1
        %s174 = smul.addr %s173, 2
        %s175 = scalar_lea.vmem [#allocation7], %s174
        %v176 = vld [vmem:[%s149] sm:$0x3]
        %v177 = vld [vmem:[#allocation5] sm:$0x3]
        %v178 = vadd.f32 %v176, %v177
        %179 = vst [vmem:[%s175] sm:$0x3] %v178
        %s180 = sand.u32 %s75, 1
        %s181 = scalar_lea.sflag [#allocation4], %s180
        %s182 = sand.u32 %s75, 1
        %s183 = smul.addr %s182, 2
        %s184 = scalar_lea.vmem [#allocation7], %s183
        // Predicated region
        $region37: #{tpu_custom_call.1} parent=27 // pred_check
          %p185 = pneg %p85
        $region38: #{tpu_custom_call.1} parent=27 // pred_check_branch
          %187 = sbr.rel (%p185) target = $region40
        $region39: #{tpu_custom_call.1} parent=27 // pred_region
          %189 = vsyncadd %s181, 0
          %s190 = smul.addr %s20, 2
          %s191 = scalar_lea.hbm %s2, %s190
          %s193 = sshll.u32 %s184, 4
          %s194 = int_to_ptr.vmem [resolvable:$true] %s193
          %s195 = sshll.u32 %s191, 4
          %s196 = int_to_ptr.hbm [resolvable:$true] %s195
          %198 = dma.vmem_to_hbm [thread:$0]  %s194, 32, %s196, %s181
        $region40: #{tpu_custom_call.1} parent=27 // pred_fallthru
          _
      $region28: #{tpu_custom_call.1} parent=5 // pred_fallthru
        _
      %p199 = scmp.le.s32.totalorder 2, %s15
      // Predicated region
      $region41: #{tpu_custom_call.1} parent=5 // pred_check
        %p200 = pneg %p199
      $region42: #{tpu_custom_call.1} parent=5 // pred_check_branch
        %202 = sbr.rel (%p200) target = $region44
      $region43: #{tpu_custom_call.1} parent=5 // pred_region
        %s203 = ssub.s32 %s15, 2
        // Predicated region
        $region45: #{tpu_custom_call.1} parent=43 // pred_check
          %p204 = pneg %p91
        $region46: #{tpu_custom_call.1} parent=43 // pred_check_branch
          %206 = sbr.rel (%p204) target = $region48
        $region47: #{tpu_custom_call.1} parent=43 // pred_region
          %s207 = sand.u32 %s76, 1
          %s208 = scalar_lea.sflag [#allocation4], %s207
          %s209 = sand.u32 %s76, 1
          %s210 = smul.addr %s209, 2
          %s211 = scalar_lea.vmem [#allocation7], %s210
          %213 = dma.done %s208, 32
        $region48: #{tpu_custom_call.1} parent=43 // pred_fallthru
          _
      $region44: #{tpu_custom_call.1} parent=5 // pred_fallthru
        _
    $region6: #{tpu_custom_call.1} parent=1 // loop_footer
      %s19 = sadd.s32 1, %s15
    $region7: #{tpu_custom_call.1} parent=1 // loop_footer_branch
      %14 = sbr.rel target = $region3
    $region8: #{tpu_custom_call.1} parent=1 // loop_exit
      _
    %214 = vsyncpa [#allocation3], 1
    %s215 = scalar_lea.sflag [#allocation3], 1
    %216 = vsyncpa %s215, 1
    %217 = vsyncpa [#allocation6], 1
    %218 = vsyncpa [#allocation4], 1
    %s219 = scalar_lea.sflag [#allocation4], 1
    %220 = vsyncpa %s219, 1

</llo_original>
